<compile_context>
chip_gen: v6e
topology: v6e:2x2x1
jax: 0.10.0
libtpu: 0.0.40
codegen_flags: <defaults>
</compile_context>

<pallas_src>
import functools

import jax
import jax.numpy as jnp
from jax import lax
from jax.experimental import pallas as pl
from jax.experimental.pallas import tpu as pltpu


def _pair(v):
    if isinstance(v, (tuple, list)):
        a, b = v
        return int(a), int(b)
    return int(v), int(v)


def _maxpool_kernel(x_ref, o_ref, t_ref, *pad_scratch,
                    Kh, Kw, sh, sw, dh, dw, ph, pw, OH, OW, pad_val):
    """Separable max-pool of a block of (H, W) planes.

    x_ref: (P, H, W) VMEM tile (lane axis = W, sublane axis = H).
    o_ref: (P, OH, OW) VMEM tile.
    t_ref: (P, Wp, OH) VMEM scratch holding the transposed H-pooled result.
    pad_scratch: optional (P, Hp, Wp) VMEM scratch (only when padding != 0).
    """
    if ph or pw:
        xp_ref, = pad_scratch
        _, H, W = x_ref.shape
        # Stage the block into a -inf-padded scratch; all taps stay in-bounds.
        xp_ref[...] = jnp.full(xp_ref.shape, pad_val, xp_ref.dtype)
        xp_ref[:, pl.ds(ph, H), pl.ds(pw, W)] = x_ref[...]
        src = xp_ref
    else:
        src = x_ref

    def rows(ref, start, count, stride):
        # Strided slice along the second-minor (sublane) axis only.
        if stride == 1:
            return ref[:, pl.ds(start, count), :]
        return ref[:, pl.ds(start, count, stride=stride), :]

    # Stage 1: pool along H.  Max chain keeps only ~2 values live at a time.
    hp = rows(src, 0, OH, sh)
    for kh in range(1, Kh):
        hp = jnp.maximum(hp, rows(src, kh * dh, OH, sh))

    # Bring W onto the sublane axis (in-VMEM XLU transpose of the half-size
    # intermediate) so the W-pool below is also a sublane-strided slice.
    t_ref[...] = jnp.swapaxes(hp, 1, 2)

    # Stage 2: pool along W.
    wp = rows(t_ref, 0, OW, sw)
    for kw in range(1, Kw):
        wp = jnp.maximum(wp, rows(t_ref, kw * dw, OW, sw))

    # (P, OW, OH) -> (P, OH, OW).  Masked lane stores when OW < 128 are fine:
    # the kernel is HBM-bound and the output slab is still HBM-contiguous.
    o_ref[...] = jnp.swapaxes(wp, 1, 2).astype(o_ref.dtype)


def custom_max_pool2d(x, kernel_size, stride=None, padding=0, dilation=1):
    """JAX/Pallas equivalent of CustomMaxPool2d.forward (NCHW in, NCHW out)."""
    if stride is None:
        stride = kernel_size
    Kh, Kw = _pair(kernel_size)
    sh, sw = _pair(stride)
    ph, pw = _pair(padding)
    dh, dw = _pair(dilation)

    N, C, H, W = x.shape
    Hp, Wp = H + 2 * ph, W + 2 * pw
    OH = (Hp - dh * (Kh - 1) - 1) // sh + 1
    OW = (Wp - dw * (Kw - 1) - 1) // sw + 1
    assert OH > 0 and OW > 0, "empty pooling output"

    if jnp.issubdtype(x.dtype, jnp.floating):
        pad_val = float("-inf")
    else:
        pad_val = int(jnp.iinfo(x.dtype).min)

    NC = N * C
    x_flat = x.reshape(NC, H, W)                 # free view (merges major dims)
    itemsize = jnp.dtype(x.dtype).itemsize

    # ---- per-generation VMEM budget & block sizing -------------------------
    try:
        phys_vmem = int(pltpu.get_tpu_info().vmem_capacity_bytes)
    except Exception:
        phys_vmem = 64 * 1024 * 1024             # conservative (v7x-sized)
    vmem_limit = int(min(0.75 * phys_vmem, 96 * 1024 * 1024))

    plane_in = H * W * itemsize
    plane_out = OH * OW * itemsize
    # Double-buffered in/out + single-buffered scratches + live temporaries
    # of the max chain (~2x the H-pooled intermediate).
    plane_cost = (2 * plane_in + 2 * plane_out
                  + Wp * OH * itemsize
                  + (Hp * Wp * itemsize if (ph or pw) else 0)
                  + 2 * OH * Wp * itemsize)
    margin = 2 * 1024 * 1024                      # Mosaic internal scratch
    p_fit = max(1, (vmem_limit - margin) // plane_cost)

    # ~8 MiB of input per grid step on 64 MiB parts (v7x), ~16 MiB on 128 MiB
    # parts (v5e/v6e) to amortize the ~0.35 us/step pipeline overhead.
    target_in = (8 if phys_vmem <= 64 * 1024 * 1024 else 16) * 1024 * 1024
    p_target = max(1, target_in // plane_in)

    P = int(min(NC, p_fit, p_target))
    if NC >= 2:
        # Guarantee >= 2 grid steps so DMA/compute overlap and both v7x
        # TensorCores get work even at batch 1.
        P = min(P, pl.cdiv(NC, 2))
    grid = (pl.cdiv(NC, P),)                      # ragged last block is fine

    scratch_shapes = [pltpu.VMEM((P, Wp, OH), x.dtype)]
    if ph or pw:
        scratch_shapes.append(pltpu.VMEM((P, Hp, Wp), x.dtype))

    kernel = functools.partial(
        _maxpool_kernel, Kh=Kh, Kw=Kw, sh=sh, sw=sw, dh=dh, dw=dw,
        ph=ph, pw=pw, OH=OH, OW=OW, pad_val=pad_val)

    cost = pl.CostEstimate(
        flops=NC * OH * OW * Kh * Kw,             # Kh*Kw compares per output
        transcendentals=0,
        bytes_accessed=(NC * H * W + NC * OH * OW) * itemsize)

    out_flat = pl.pallas_call(
        kernel,
        out_shape=jax.ShapeDtypeStruct((NC, OH, OW), x.dtype),
        grid=grid,
        in_specs=[pl.BlockSpec((P, H, W), lambda i: (i, 0, 0))],
        out_specs=pl.BlockSpec((P, OH, OW), lambda i: (i, 0, 0)),
        scratch_shapes=scratch_shapes,
        compiler_params=pltpu.CompilerParams(
            dimension_semantics=("parallel",),
            vmem_limit_bytes=vmem_limit,
        ),
        cost_estimate=cost,
    )(x_flat)

    return out_flat.reshape(N, C, OH, OW)         # free view back to NCHW


if __name__ == "__main__":
    key = jax.random.PRNGKey(0)
    x = jax.random.normal(key, (2, 4, 16, 16), dtype=jnp.float32)

    # VGG19 maxpool configuration: kernel_size=2, stride=2, padding=0.
    y = jax.block_until_ready(custom_max_pool2d(x, 2, 2, 0, 1))
    ref = lax.reduce_window(x, -jnp.inf, lax.max,
                            (1, 1, 2, 2), (1, 1, 2, 2), "VALID")
    assert y.shape == (2, 4, 8, 8), y.shape
    assert jnp.allclose(y, ref), "mismatch (2x2 / s2)"

    # Overlapping window + padding (exercises the in-kernel pad scratch).
    y2 = jax.block_until_ready(custom_max_pool2d(x, 3, stride=2, padding=1))
    ref2 = lax.reduce_window(x, -jnp.inf, lax.max,
                             (1, 1, 3, 3), (1, 1, 2, 2),
                             ((0, 0), (0, 0), (1, 1), (1, 1)))
    assert y2.shape == (2, 4, 8, 8), y2.shape
    assert jnp.allclose(y2, ref2), "mismatch (3x3 / s2 / p1)"

    # Dilated window, stride 1.
    y3 = jax.block_until_ready(
        custom_max_pool2d(x, 2, stride=1, padding=0, dilation=2))
    ref3 = lax.reduce_window(x, -jnp.inf, lax.max,
                             (1, 1, 2, 2), (1, 1, 1, 1), "VALID",
                             window_dilation=(1, 1, 2, 2))
    assert y3.shape == (2, 4, 14, 14), y3.shape
    assert jnp.allclose(y3, ref3), "mismatch (2x2 / s1 / d2)"

    # Ragged grid: N*C not a multiple of the per-step plane count.
    x4 = jax.random.normal(jax.random.PRNGKey(0), (3, 5, 16, 16), jnp.float32)
    y4 = jax.block_until_ready(custom_max_pool2d(x4, 2, 2))
    ref4 = lax.reduce_window(x4, -jnp.inf, lax.max,
                             (1, 1, 2, 2), (1, 1, 2, 2), "VALID")
    assert jnp.allclose(y4, ref4), "mismatch (ragged N*C grid)"

    print("KERNEL_OK")
</pallas_src>

<mosaic_0001>
module attributes {stable_mosaic.version = 11 : i64} {
  func.func @_maxpool_kernel(%arg0: i32, %arg1: memref<4x16x16xf32, #tpu.memory_space<vmem>>, %arg2: memref<4x8x8xf32, #tpu.memory_space<vmem>>, %arg3: memref<4x16x8xf32, #tpu.memory_space<vmem>>) attributes {dimension_semantics = [#tpu.dimension_semantics<parallel>], iteration_bounds = array<i64: 2>, scalar_prefetch = 0 : i64, scratch_operands = 1 : i64, tpu.core_type = #tpu.core_type<tc>, window_params = [{transform_indices = @transform_0, window_bounds = array<i64: 4, 16, 16>}, {transform_indices = @transform_1, window_bounds = array<i64: 4, 8, 8>}]} {
    %c0 = arith.constant 0 : index
    %c0_0 = arith.constant 0 : index
    %c0_1 = arith.constant 0 : index
    %0 = tpu.strided_load %arg1[%c0, %c0_0, %c0_1] {strides = array<i32: 1, 2, 1>} : memref<4x16x16xf32, #tpu.memory_space<vmem>>, vector<4x8x16xf32>
    %c0_2 = arith.constant 0 : index
    %c1 = arith.constant 1 : index
    %c0_3 = arith.constant 0 : index
    %1 = tpu.strided_load %arg1[%c0_2, %c1, %c0_3] {strides = array<i32: 1, 2, 1>} : memref<4x16x16xf32, #tpu.memory_space<vmem>>, vector<4x8x16xf32>
    %2 = arith.maximumf %0, %1 : vector<4x8x16xf32>
    %3 = tpu.transpose %2, [0, 2, 1] : vector<4x8x16xf32> -> vector<4x16x8xf32>
    %c0_4 = arith.constant 0 : index
    %c0_5 = arith.constant 0 : index
    %c0_6 = arith.constant 0 : index
    %4 = vector.load %arg3[%c0_4, %c0_5, %c0_6] : memref<4x16x8xf32, #tpu.memory_space<vmem>>, vector<4x16x8xf32>
    tpu.vector_store %arg3[%c0_4, %c0_5, %c0_6], %3 {strides = array<i32>} : memref<4x16x8xf32, #tpu.memory_space<vmem>>, vector<4x16x8xf32>,
    %c0_7 = arith.constant 0 : index
    %c0_8 = arith.constant 0 : index
    %c0_9 = arith.constant 0 : index
    %5 = tpu.strided_load %arg3[%c0_7, %c0_8, %c0_9] {strides = array<i32: 1, 2, 1>} : memref<4x16x8xf32, #tpu.memory_space<vmem>>, vector<4x8x8xf32>
    %c0_10 = arith.constant 0 : index
    %c1_11 = arith.constant 1 : index
    %c0_12 = arith.constant 0 : index
    %6 = tpu.strided_load %arg3[%c0_10, %c1_11, %c0_12] {strides = array<i32: 1, 2, 1>} : memref<4x16x8xf32, #tpu.memory_space<vmem>>, vector<4x8x8xf32>
    %7 = arith.maximumf %5, %6 : vector<4x8x8xf32>
    %8 = tpu.transpose %7, [0, 2, 1] : vector<4x8x8xf32> -> vector<4x8x8xf32>
    %c0_13 = arith.constant 0 : index
    %c0_14 = arith.constant 0 : index
    %c0_15 = arith.constant 0 : index
    %9 = vector.load %arg2[%c0_13, %c0_14, %c0_15] : memref<4x8x8xf32, #tpu.memory_space<vmem>>, vector<4x8x8xf32>
    tpu.vector_store %arg2[%c0_13, %c0_14, %c0_15], %8 {strides = array<i32>} : memref<4x8x8xf32, #tpu.memory_space<vmem>>, vector<4x8x8xf32>,
    return
  }
  func.func @transform_0(%arg0: i32) -> (i32, i32, i32) {
    %c0_i32 = arith.constant 0 : i32
    %c0_i32_0 = arith.constant 0 : i32
    %c0_i32_1 = arith.constant 0 : i32
    return %arg0, %c0_i32, %c0_i32_0 : i32, i32, i32
  }
  func.func @transform_1(%arg0: i32) -> (i32, i32, i32) {
    %c0_i32 = arith.constant 0 : i32
    %c0_i32_0 = arith.constant 0 : i32
    %c0_i32_1 = arith.constant 0 : i32
    return %arg0, %c0_i32, %c0_i32_0 : i32, i32, i32
  }
}

</mosaic_0001>

<llo_original>
// kernel: tpu_custom_call.1
$region0: #{tpu_custom_call.1}
  #allocation0 [shape = 'u32[]', space=smem, size = 0x4, offset = 0x4, fixed_abs, tag = 'smem constant byte address 0x4 - core index']
  #allocation1 [shape = 'u32[144,128]{1,0:T(1,128)}', space=vmem, size = 0x12000, scoped, tag = 'internal scratch']
  #allocation2 [shape = 'f32[4,16,8]{2,1,0:T(8,128)}', space=vmem, size = 0x8000, scoped, tag = 'scratch operand']
  %s0 = inlined_call_operand.hbm [shape: f32[8,16,16], index: 0, kind: input, shape index: {}]
  %s1 = inlined_call_operand.hbm [shape: f32[8,8,8], index: 1, kind: output, shape index: {}]
  %s2 = sld [smem:[#allocation0]]
  $region41: #{tpu_custom_call.1} parent=0
    _
  %s4 = ssub.s32 1, %s2
  %s5 = scalar_select 0, %s4, %s2
  $region1: #{tpu_custom_call.1} parent=0
    #allocation3 [shape = 'u8[65536]{0}', space=vmem, size = 0x10000, scoped, tag = 'input window, operand 0']
    #allocation4 [shape = 's32[2]{0}', space=sflag, size = 0x8, scoped, tag = 'scoped memory for tpu_custom_call.1']
    #allocation5 [shape = 's32[2]{0}', space=sflag, size = 0x8, scoped, tag = 'scoped memory for tpu_custom_call.1']
    #allocation6 [shape = 'u8[32768]{0}', space=vmem, size = 0x8000, scoped, tag = 'output window, operand 0']
    %6 = vsyncpa [#allocation4], 0
    %s7 = scalar_lea.sflag [#allocation4], 1
    %8 = vsyncpa %s7, 0
    %9 = vsyncpa [#allocation5], 0
    %s10 = scalar_lea.sflag [#allocation5], 1
    %11 = vsyncpa %s10, 0
    loop: start=0, step=1, limit=4
    $region2: #{tpu_custom_call.1} parent=1 // loop_pre_header
      _
    $region3: #{tpu_custom_call.1} parent=1 // loop_header
      %s13 = sphi 0, %s17
      %p14 = scmp.ge.s32.totalorder %s13, 4
      %s23 = sphi 0, %s25
      %s26 = sphi 0, %s23
      %s27 = sphi 0, %s26
      %s43 = sphi 0, %s27
      %s49 = sphi 0, %s51
      %s52 = sphi 0, %s49
      %s53 = sphi 0, %s52
      %s69 = sphi 0, %s53
    $region4: #{tpu_custom_call.1} parent=1 // loop_header_branch
      %16 = sbr.rel (%p14) target = $region8
    $region5: #{tpu_custom_call.1} parent=1 // loop_body
      %s18 = ssub.s32 %s13, 1
      %s19 = ssub.s32 %s13, 2
      %s20 = sadd.s32 %s13, 1
      %s21 = ssub.s32 %s13, %s20
      %p22 = scmp.eq.s32.totalorder %s21, 0
      %s24 = sadd.s32 %s23, 1
      %s25 = scalar_select %p22, %s23, %s24
      %p28 = pneg %p22
      %p29 = scmp.eq.s32.totalorder %s13, 1
      %p30 = por %p28, %p29
      %p31 = scmp.ne.s32.totalorder %s23, %s26
      %p32 = scmp.eq.s32.totalorder %s13, 0
      %p33 = por %p31, %p32
      %p34 = scmp.ne.s32.totalorder %s23, %s26
      %p35 = scmp.eq.s32.totalorder %s18, 1
      %p36 = por %p34, %p35
      %p37 = scmp.ne.s32.totalorder %s26, %s27
      %p38 = scmp.eq.s32.totalorder %s18, 0
      %p39 = por %p37, %p38
      %p40 = scmp.ne.s32.totalorder %s26, %s27
      %p41 = scmp.eq.s32.totalorder %s19, 1
      %p42 = por %p40, %p41
      %p44 = scmp.ne.s32.totalorder %s27, %s43
      %p45 = scmp.eq.s32.totalorder %s19, 0
      %p46 = por %p44, %p45
      %s47 = ssub.s32 %s13, %s20
      %p48 = scmp.eq.s32.totalorder %s47, 0
      %s50 = sadd.s32 %s49, 1
      %s51 = scalar_select %p48, %s49, %s50
      %p54 = pneg %p48
      %p55 = scmp.eq.s32.totalorder %s13, 1
      %p56 = por %p54, %p55
      %p57 = scmp.ne.s32.totalorder %s49, %s52
      %p58 = scmp.eq.s32.totalorder %s13, 0
      %p59 = por %p57, %p58
      %p60 = scmp.ne.s32.totalorder %s49, %s52
      %p61 = scmp.eq.s32.totalorder %s18, 1
      %p62 = por %p60, %p61
      %p63 = scmp.ne.s32.totalorder %s52, %s53
      %p64 = scmp.eq.s32.totalorder %s18, 0
      %p65 = por %p63, %p64
      %p66 = scmp.ne.s32.totalorder %s52, %s53
      %p67 = scmp.eq.s32.totalorder %s19, 1
      %p68 = por %p66, %p67
      %p70 = scmp.ne.s32.totalorder %s53, %s69
      %p71 = scmp.eq.s32.totalorder %s19, 0
      %p72 = por %p70, %p71
      %p73 = scmp.le.s32.totalorder 1, %s13
      %p74 = scmp.lt.s32.totalorder %s13, 3
      %p75 = pnand %p73, %p74
      %p76 = pneg %p75
      // Predicated region
      $region9: #{tpu_custom_call.1} parent=5 // pred_check
        _
      $region10: #{tpu_custom_call.1} parent=5 // pred_check_branch
        %78 = sbr.rel (%p75) target = $region12
      $region11: #{tpu_custom_call.1} parent=5 // pred_region
        %s79 = ssub.s32 %s13, 1
      $region12: #{tpu_custom_call.1} parent=5 // pred_fallthru
        _
      %p80 = scmp.lt.s32.totalorder %s13, 2
      // Predicated region
      $region13: #{tpu_custom_call.1} parent=5 // pred_check
        %p81 = pneg %p80
      $region14: #{tpu_custom_call.1} parent=5 // pred_check_branch
        %83 = sbr.rel (%p81) target = $region16
      $region15: #{tpu_custom_call.1} parent=5 // pred_region
        // Predicated region
        $region17: #{tpu_custom_call.1} parent=15 // pred_check
          %p84 = pneg %p33
        $region18: #{tpu_custom_call.1} parent=15 // pred_check_branch
          %86 = sbr.rel (%p84) target = $region20
        $region19: #{tpu_custom_call.1} parent=15 // pred_region
          %s87 = sand.u32 %s23, 1
          %s88 = scalar_lea.sflag [#allocation4], %s87
          %s89 = sand.u32 %s23, 1
          %s90 = smul.addr %s89, 64
          %s91 = scalar_lea.vmem [#allocation3], %s90
          %s92 = smul.u32 4, %s13
          %s94 = ssub.s32 1024, 1024
          %95 = vsyncadd %s88, %s94
          %s96 = smul.addr %s92, 2
          %s97 = smul.addr %s96, 128
          %s98 = scalar_lea.hbm %s0, %s97
          %s99 = sshll.u32 %s91, 4
          %s100 = int_to_ptr.vmem [resolvable:$true] %s99
          %105 = dma.hbm_to_vmem [thread:$0]  %s98, 1024, %s100, %s88, 128, 128, 8
        $region20: #{tpu_custom_call.1} parent=15 // pred_fallthru
          _
      $region16: #{tpu_custom_call.1} parent=5 // pred_fallthru
        _
      %p106 = scmp.le.s32.totalorder 1, %s13
      %p107 = scmp.lt.s32.totalorder %s13, 3
      %p108 = pnand %p106, %p107
      %p109 = pneg %p108
      // Predicated region
      $region21: #{tpu_custom_call.1} parent=5 // pred_check
        _
      $region22: #{tpu_custom_call.1} parent=5 // pred_check_branch
        %111 = sbr.rel (%p108) target = $region24
      $region23: #{tpu_custom_call.1} parent=5 // pred_region
        %s112 = ssub.s32 %s13, 1
        %s113 = sand.u32 %s26, 1
        %s114 = scalar_lea.sflag [#allocation4], %s113
        %s115 = sand.u32 %s26, 1
        %s116 = smul.addr %s115, 64
        %s117 = scalar_lea.vmem [#allocation3], %s116
        // Predicated region
        $region25: #{tpu_custom_call.1} parent=23 // pred_check
          %p118 = pneg %p39
        $region26: #{tpu_custom_call.1} parent=23 // pred_check_branch
          %120 = sbr.rel (%p118) target = $region28
        $region27: #{tpu_custom_call.1} parent=23 // pred_region
          %121 = dma.done %s114, 1024
        $region28: #{tpu_custom_call.1} parent=23 // pred_fallthru
          _
        %s122 = sand.u32 %s26, 1
        %s123 = scalar_lea.sflag [#allocation4], %s122
        %s124 = sand.u32 %s26, 1
        %s125 = smul.addr %s124, 64
        %s126 = scalar_lea.vmem [#allocation3], %s125
        %p127 = pneg %p39
        %p128 = pneg %p36
        %p129 = pneg %p65
        %p130 = pneg %p62
        %s131 = sand.u32 %s52, 1
        %s132 = scalar_lea.sflag [#allocation5], %s131
        %s133 = sand.u32 %s52, 1
        %s134 = smul.addr %s133, 32
        %s135 = scalar_lea.vmem [#allocation6], %s134
        %s136 = smul.u32 4, %s18
        %s137 = smul.u32 4, %s18
        %v138 = vld [vmem:[%s117] ss:$2 sm:$0xff]
        %s139 = scalar_lea.vmem %s117, 16 [#allocation3]
        %v140 = vld [vmem:[%s139] ss:$2 sm:$0xff]
        %s141 = scalar_lea.vmem %s117, 32 [#allocation3]
        %v142 = vld [vmem:[%s141] ss:$2 sm:$0xff]
        %s143 = scalar_lea.vmem %s117, 48 [#allocation3]
        %v144 = vld [vmem:[%s143] ss:$2 sm:$0xff]
        %s145 = scalar_lea.vmem %s117, 1 [#allocation3]
        %v146 = vld [vmem:[%s145] ss:$2 sm:$0xff]
        %s147 = scalar_lea.vmem %s117, 17 [#allocation3]
        %v148 = vld [vmem:[%s147] ss:$2 sm:$0xff]
        %s149 = scalar_lea.vmem %s117, 33 [#allocation3]
        %v150 = vld [vmem:[%s149] ss:$2 sm:$0xff]
        %s151 = scalar_lea.vmem %s117, 49 [#allocation3]
        %v152 = vld [vmem:[%s151] ss:$2 sm:$0xff]
        %v153 = vmax.f32 %v138, %v146
        %v154 = vmax.f32 %v140, %v148
        %v155 = vmax.f32 %v142, %v150
        %v156 = vmax.f32 %v144, %v152
        %157 = vxpose.xlu0.b32.start [1/16] %v153, 128
        %158 = vxpose.xlu0.b32.cont [2/16] 0.0, 128
        %159 = vxpose.xlu0.b32.cont [3/16] 0.0, 128
        %160 = vxpose.xlu0.b32.cont [4/16] 0.0, 128
        %161 = vxpose.xlu0.b32.cont [5/16] 0.0, 128
        %162 = vxpose.xlu0.b32.cont [6/16] 0.0, 128
        %163 = vxpose.xlu0.b32.cont [7/16] 0.0, 128
        %164 = vxpose.xlu0.b32.cont [8/16] 0.0, 128
        %165 = vxpose.xlu0.b32.cont [9/16] 0.0, 128
        %166 = vxpose.xlu0.b32.cont [10/16] 0.0, 128
        %167 = vxpose.xlu0.b32.cont [11/16] 0.0, 128
        %168 = vxpose.xlu0.b32.cont [12/16] 0.0, 128
        %169 = vxpose.xlu0.b32.cont [13/16] 0.0, 128
        %170 = vxpose.xlu0.b32.cont [14/16] 0.0, 128
        %171 = vxpose.xlu0.b32.cont [15/16] 0.0, 128
        %172 = vxpose.xlu0.b32.end [16/16] 0.0, 128
        %v173 = vpop.trf.xlu0
        %v174 = vpop.trf.xlu0
        %v175 = vpop.trf.xlu0
        %v176 = vpop.trf.xlu0
        %v177 = vpop.trf.xlu0
        %v178 = vpop.trf.xlu0
        %v179 = vpop.trf.xlu0
        %v180 = vpop.trf.xlu0
        %v181 = vpop.trf.xlu0
        %v182 = vpop.trf.xlu0
        %v183 = vpop.trf.xlu0
        %v184 = vpop.trf.xlu0
        %v185 = vpop.trf.xlu0
        %v186 = vpop.trf.xlu0
        %v187 = vpop.trf.xlu0
        %v188 = vpop.trf.xlu0
        %189 = vxpose.xlu0.b32.start [1/16] %v154, 128
        %190 = vxpose.xlu0.b32.cont [2/16] 0.0, 128
        %191 = vxpose.xlu0.b32.cont [3/16] 0.0, 128
        %192 = vxpose.xlu0.b32.cont [4/16] 0.0, 128
        %193 = vxpose.xlu0.b32.cont [5/16] 0.0, 128
        %194 = vxpose.xlu0.b32.cont [6/16] 0.0, 128
        %195 = vxpose.xlu0.b32.cont [7/16] 0.0, 128
        %196 = vxpose.xlu0.b32.cont [8/16] 0.0, 128
        %197 = vxpose.xlu0.b32.cont [9/16] 0.0, 128
        %198 = vxpose.xlu0.b32.cont [10/16] 0.0, 128
        %199 = vxpose.xlu0.b32.cont [11/16] 0.0, 128
        %200 = vxpose.xlu0.b32.cont [12/16] 0.0, 128
        %201 = vxpose.xlu0.b32.cont [13/16] 0.0, 128
        %202 = vxpose.xlu0.b32.cont [14/16] 0.0, 128
        %203 = vxpose.xlu0.b32.cont [15/16] 0.0, 128
        %204 = vxpose.xlu0.b32.end [16/16] 0.0, 128
        %v205 = vpop.trf.xlu0
        %v206 = vpop.trf.xlu0
        %v207 = vpop.trf.xlu0
        %v208 = vpop.trf.xlu0
        %v209 = vpop.trf.xlu0
        %v210 = vpop.trf.xlu0
        %v211 = vpop.trf.xlu0
        %v212 = vpop.trf.xlu0
        %v213 = vpop.trf.xlu0
        %v214 = vpop.trf.xlu0
        %v215 = vpop.trf.xlu0
        %v216 = vpop.trf.xlu0
        %v217 = vpop.trf.xlu0
        %v218 = vpop.trf.xlu0
        %v219 = vpop.trf.xlu0
        %v220 = vpop.trf.xlu0
        %221 = vxpose.xlu0.b32.start [1/16] %v155, 128
        %222 = vxpose.xlu0.b32.cont [2/16] 0.0, 128
        %223 = vxpose.xlu0.b32.cont [3/16] 0.0, 128
        %224 = vxpose.xlu0.b32.cont [4/16] 0.0, 128
        %225 = vxpose.xlu0.b32.cont [5/16] 0.0, 128
        %226 = vxpose.xlu0.b32.cont [6/16] 0.0, 128
        %227 = vxpose.xlu0.b32.cont [7/16] 0.0, 128
        %228 = vxpose.xlu0.b32.cont [8/16] 0.0, 128
        %229 = vxpose.xlu0.b32.cont [9/16] 0.0, 128
        %230 = vxpose.xlu0.b32.cont [10/16] 0.0, 128
        %231 = vxpose.xlu0.b32.cont [11/16] 0.0, 128
        %232 = vxpose.xlu0.b32.cont [12/16] 0.0, 128
        %233 = vxpose.xlu0.b32.cont [13/16] 0.0, 128
        %234 = vxpose.xlu0.b32.cont [14/16] 0.0, 128
        %235 = vxpose.xlu0.b32.cont [15/16] 0.0, 128
        %236 = vxpose.xlu0.b32.end [16/16] 0.0, 128
        %v237 = vpop.trf.xlu0
        %v238 = vpop.trf.xlu0
        %v239 = vpop.trf.xlu0
        %v240 = vpop.trf.xlu0
        %v241 = vpop.trf.xlu0
        %v242 = vpop.trf.xlu0
        %v243 = vpop.trf.xlu0
        %v244 = vpop.trf.xlu0
        %v245 = vpop.trf.xlu0
        %v246 = vpop.trf.xlu0
        %v247 = vpop.trf.xlu0
        %v248 = vpop.trf.xlu0
        %v249 = vpop.trf.xlu0
        %v250 = vpop.trf.xlu0
        %v251 = vpop.trf.xlu0
        %v252 = vpop.trf.xlu0
        %253 = vxpose.xlu0.b32.start [1/16] %v156, 128
        %254 = vxpose.xlu0.b32.cont [2/16] 0.0, 128
        %255 = vxpose.xlu0.b32.cont [3/16] 0.0, 128
        %256 = vxpose.xlu0.b32.cont [4/16] 0.0, 128
        %257 = vxpose.xlu0.b32.cont [5/16] 0.0, 128
        %258 = vxpose.xlu0.b32.cont [6/16] 0.0, 128
        %259 = vxpose.xlu0.b32.cont [7/16] 0.0, 128
        %260 = vxpose.xlu0.b32.cont [8/16] 0.0, 128
        %261 = vxpose.xlu0.b32.cont [9/16] 0.0, 128
        %262 = vxpose.xlu0.b32.cont [10/16] 0.0, 128
        %263 = vxpose.xlu0.b32.cont [11/16] 0.0, 128
        %264 = vxpose.xlu0.b32.cont [12/16] 0.0, 128
        %265 = vxpose.xlu0.b32.cont [13/16] 0.0, 128
        %266 = vxpose.xlu0.b32.cont [14/16] 0.0, 128
        %267 = vxpose.xlu0.b32.cont [15/16] 0.0, 128
        %268 = vxpose.xlu0.b32.end [16/16] 0.0, 128
        %v269 = vpop.trf.xlu0
        %v270 = vpop.trf.xlu0
        %v271 = vpop.trf.xlu0
        %v272 = vpop.trf.xlu0
        %v273 = vpop.trf.xlu0
        %v274 = vpop.trf.xlu0
        %v275 = vpop.trf.xlu0
        %v276 = vpop.trf.xlu0
        %v277 = vpop.trf.xlu0
        %v278 = vpop.trf.xlu0
        %v279 = vpop.trf.xlu0
        %v280 = vpop.trf.xlu0
        %v281 = vpop.trf.xlu0
        %v282 = vpop.trf.xlu0
        %v283 = vpop.trf.xlu0
        %v284 = vpop.trf.xlu0
        %vm285 = vcmask 64512
        %286 = vst.msk [vmem:[#allocation2] sm:$0xff] %vm285, %v173
        %287 = vst.msk [vmem:[#allocation2 + $0x8] sm:$0xff] %vm285, %v174
        %288 = vst.msk [vmem:[#allocation2 + $0x10] sm:$0xff] %vm285, %v205
        %289 = vst.msk [vmem:[#allocation2 + $0x18] sm:$0xff] %vm285, %v206
        %290 = vst.msk [vmem:[#allocation2 + $0x20] sm:$0xff] %vm285, %v237
        %291 = vst.msk [vmem:[#allocation2 + $0x28] sm:$0xff] %vm285, %v238
        %292 = vst.msk [vmem:[#allocation2 + $0x30] sm:$0xff] %vm285, %v269
        %293 = vst.msk [vmem:[#allocation2 + $0x38] sm:$0xff] %vm285, %v270
        %v294 = vld [vmem:[#allocation2] ss:$2 sm:$0xff]
        %s295 = scalar_lea.vmem [#allocation2], 16
        %v296 = vld [vmem:[%s295] ss:$2 sm:$0xff]
        %s297 = scalar_lea.vmem [#allocation2], 32
        %v298 = vld [vmem:[%s297] ss:$2 sm:$0xff]
        %s299 = scalar_lea.vmem [#allocation2], 48
        %v300 = vld [vmem:[%s299] ss:$2 sm:$0xff]
        %s301 = scalar_lea.vmem [#allocation2], 1
        %v302 = vld [vmem:[%s301] ss:$2 sm:$0xff]
        %s303 = scalar_lea.vmem [#allocation2], 17
        %v304 = vld [vmem:[%s303] ss:$2 sm:$0xff]
        %s305 = scalar_lea.vmem [#allocation2], 33
        %v306 = vld [vmem:[%s305] ss:$2 sm:$0xff]
        %s307 = scalar_lea.vmem [#allocation2], 49
        %v308 = vld [vmem:[%s307] ss:$2 sm:$0xff]
        %v309 = vmax.f32 %v294, %v302
        %v310 = vmax.f32 %v296, %v304
        %v311 = vmax.f32 %v298, %v306
        %v312 = vmax.f32 %v300, %v308
        %313 = vxpose.xlu0.b32.start [1/16] %v309, 128
        %314 = vxpose.xlu0.b32.cont [2/16] 0.0, 128
        %315 = vxpose.xlu0.b32.cont [3/16] 0.0, 128
        %316 = vxpose.xlu0.b32.cont [4/16] 0.0, 128
        %317 = vxpose.xlu0.b32.cont [5/16] 0.0, 128
        %318 = vxpose.xlu0.b32.cont [6/16] 0.0, 128
        %319 = vxpose.xlu0.b32.cont [7/16] 0.0, 128
        %320 = vxpose.xlu0.b32.cont [8/16] 0.0, 128
        %321 = vxpose.xlu0.b32.cont [9/16] 0.0, 128
        %322 = vxpose.xlu0.b32.cont [10/16] 0.0, 128
        %323 = vxpose.xlu0.b32.cont [11/16] 0.0, 128
        %324 = vxpose.xlu0.b32.cont [12/16] 0.0, 128
        %325 = vxpose.xlu0.b32.cont [13/16] 0.0, 128
        %326 = vxpose.xlu0.b32.cont [14/16] 0.0, 128
        %327 = vxpose.xlu0.b32.cont [15/16] 0.0, 128
        %328 = vxpose.xlu0.b32.end [16/16] 0.0, 128
        %v329 = vpop.trf.xlu0
        %v330 = vpop.trf.xlu0
        %v331 = vpop.trf.xlu0
        %v332 = vpop.trf.xlu0
        %v333 = vpop.trf.xlu0
        %v334 = vpop.trf.xlu0
        %v335 = vpop.trf.xlu0
        %v336 = vpop.trf.xlu0
        %v337 = vpop.trf.xlu0
        %v338 = vpop.trf.xlu0
        %v339 = vpop.trf.xlu0
        %v340 = vpop.trf.xlu0
        %v341 = vpop.trf.xlu0
        %v342 = vpop.trf.xlu0
        %v343 = vpop.trf.xlu0
        %v344 = vpop.trf.xlu0
        %345 = vxpose.xlu0.b32.start [1/16] %v310, 128
        %346 = vxpose.xlu0.b32.cont [2/16] 0.0, 128
        %347 = vxpose.xlu0.b32.cont [3/16] 0.0, 128
        %348 = vxpose.xlu0.b32.cont [4/16] 0.0, 128
        %349 = vxpose.xlu0.b32.cont [5/16] 0.0, 128
        %350 = vxpose.xlu0.b32.cont [6/16] 0.0, 128
        %351 = vxpose.xlu0.b32.cont [7/16] 0.0, 128
        %352 = vxpose.xlu0.b32.cont [8/16] 0.0, 128
        %353 = vxpose.xlu0.b32.cont [9/16] 0.0, 128
        %354 = vxpose.xlu0.b32.cont [10/16] 0.0, 128
        %355 = vxpose.xlu0.b32.cont [11/16] 0.0, 128
        %356 = vxpose.xlu0.b32.cont [12/16] 0.0, 128
        %357 = vxpose.xlu0.b32.cont [13/16] 0.0, 128
        %358 = vxpose.xlu0.b32.cont [14/16] 0.0, 128
        %359 = vxpose.xlu0.b32.cont [15/16] 0.0, 128
        %360 = vxpose.xlu0.b32.end [16/16] 0.0, 128
        %v361 = vpop.trf.xlu0
        %v362 = vpop.trf.xlu0
        %v363 = vpop.trf.xlu0
        %v364 = vpop.trf.xlu0
        %v365 = vpop.trf.xlu0
        %v366 = vpop.trf.xlu0
        %v367 = vpop.trf.xlu0
        %v368 = vpop.trf.xlu0
        %v369 = vpop.trf.xlu0
        %v370 = vpop.trf.xlu0
        %v371 = vpop.trf.xlu0
        %v372 = vpop.trf.xlu0
        %v373 = vpop.trf.xlu0
        %v374 = vpop.trf.xlu0
        %v375 = vpop.trf.xlu0
        %v376 = vpop.trf.xlu0
        %377 = vxpose.xlu0.b32.start [1/16] %v311, 128
        %378 = vxpose.xlu0.b32.cont [2/16] 0.0, 128
        %379 = vxpose.xlu0.b32.cont [3/16] 0.0, 128
        %380 = vxpose.xlu0.b32.cont [4/16] 0.0, 128
        %381 = vxpose.xlu0.b32.cont [5/16] 0.0, 128
        %382 = vxpose.xlu0.b32.cont [6/16] 0.0, 128
        %383 = vxpose.xlu0.b32.cont [7/16] 0.0, 128
        %384 = vxpose.xlu0.b32.cont [8/16] 0.0, 128
        %385 = vxpose.xlu0.b32.cont [9/16] 0.0, 128
        %386 = vxpose.xlu0.b32.cont [10/16] 0.0, 128
        %387 = vxpose.xlu0.b32.cont [11/16] 0.0, 128
        %388 = vxpose.xlu0.b32.cont [12/16] 0.0, 128
        %389 = vxpose.xlu0.b32.cont [13/16] 0.0, 128
        %390 = vxpose.xlu0.b32.cont [14/16] 0.0, 128
        %391 = vxpose.xlu0.b32.cont [15/16] 0.0, 128
        %392 = vxpose.xlu0.b32.end [16/16] 0.0, 128
        %v393 = vpop.trf.xlu0
        %v394 = vpop.trf.xlu0
        %v395 = vpop.trf.xlu0
        %v396 = vpop.trf.xlu0
        %v397 = vpop.trf.xlu0
        %v398 = vpop.trf.xlu0
        %v399 = vpop.trf.xlu0
        %v400 = vpop.trf.xlu0
        %v401 = vpop.trf.xlu0
        %v402 = vpop.trf.xlu0
        %v403 = vpop.trf.xlu0
        %v404 = vpop.trf.xlu0
        %v405 = vpop.trf.xlu0
        %v406 = vpop.trf.xlu0
        %v407 = vpop.trf.xlu0
        %v408 = vpop.trf.xlu0
        %409 = vxpose.xlu0.b32.start [1/16] %v312, 128
        %410 = vxpose.xlu0.b32.cont [2/16] 0.0, 128
        %411 = vxpose.xlu0.b32.cont [3/16] 0.0, 128
        %412 = vxpose.xlu0.b32.cont [4/16] 0.0, 128
        %413 = vxpose.xlu0.b32.cont [5/16] 0.0, 128
        %414 = vxpose.xlu0.b32.cont [6/16] 0.0, 128
        %415 = vxpose.xlu0.b32.cont [7/16] 0.0, 128
        %416 = vxpose.xlu0.b32.cont [8/16] 0.0, 128
        %417 = vxpose.xlu0.b32.cont [9/16] 0.0, 128
        %418 = vxpose.xlu0.b32.cont [10/16] 0.0, 128
        %419 = vxpose.xlu0.b32.cont [11/16] 0.0, 128
        %420 = vxpose.xlu0.b32.cont [12/16] 0.0, 128
        %421 = vxpose.xlu0.b32.cont [13/16] 0.0, 128
        %422 = vxpose.xlu0.b32.cont [14/16] 0.0, 128
        %423 = vxpose.xlu0.b32.cont [15/16] 0.0, 128
        %424 = vxpose.xlu0.b32.end [16/16] 0.0, 128
        %v425 = vpop.trf.xlu0
        %v426 = vpop.trf.xlu0
        %v427 = vpop.trf.xlu0
        %v428 = vpop.trf.xlu0
        %v429 = vpop.trf.xlu0
        %v430 = vpop.trf.xlu0
        %v431 = vpop.trf.xlu0
        %v432 = vpop.trf.xlu0
        %v433 = vpop.trf.xlu0
        %v434 = vpop.trf.xlu0
        %v435 = vpop.trf.xlu0
        %v436 = vpop.trf.xlu0
        %v437 = vpop.trf.xlu0
        %v438 = vpop.trf.xlu0
        %v439 = vpop.trf.xlu0
        %v440 = vpop.trf.xlu0
        %441 = vst.msk [vmem:[%s135] sm:$0xff] %vm285, %v329
        %442 = vst.msk [vmem:[%s135 + $0x8] sm:$0xff] %vm285, %v361
        %443 = vst.msk [vmem:[%s135 + $0x10] sm:$0xff] %vm285, %v393
        %444 = vst.msk [vmem:[%s135 + $0x18] sm:$0xff] %vm285, %v425
        %s445 = sand.u32 %s52, 1
        %s446 = scalar_lea.sflag [#allocation5], %s445
        %s447 = sand.u32 %s52, 1
        %s448 = smul.addr %s447, 32
        %s449 = scalar_lea.vmem [#allocation6], %s448
        // Predicated region
        $region29: #{tpu_custom_call.1} parent=23 // pred_check
          %p450 = pneg %p62
        $region30: #{tpu_custom_call.1} parent=23 // pred_check_branch
          %452 = sbr.rel (%p450) target = $region32
        $region31: #{tpu_custom_call.1} parent=23 // pred_region
          %s453 = smul.u32 4, %s18
          %s455 = ssub.s32 512, 512
          %456 = vsyncadd %s446, %s455
          %s457 = smul.addr %s453, 128
          %s458 = scalar_lea.hbm %s1, %s457
          %s459 = sshll.u32 %s449, 4
          %s460 = int_to_ptr.vmem [resolvable:$true] %s459
          %465 = dma.vmem_to_hbm [thread:$0]  %s460, 512, %s458, %s446, 128, 128, 8
        $region32: #{tpu_custom_call.1} parent=23 // pred_fallthru
          _
      $region24: #{tpu_custom_call.1} parent=5 // pred_fallthru
        _
      %p466 = scmp.le.s32.totalorder 2, %s13
      // Predicated region
      $region33: #{tpu_custom_call.1} parent=5 // pred_check
        %p467 = pneg %p466
      $region34: #{tpu_custom_call.1} parent=5 // pred_check_branch
        %469 = sbr.rel (%p467) target = $region36
      $region35: #{tpu_custom_call.1} parent=5 // pred_region
        %s470 = ssub.s32 %s13, 2
        // Predicated region
        $region37: #{tpu_custom_call.1} parent=35 // pred_check
          %p471 = pneg %p68
        $region38: #{tpu_custom_call.1} parent=35 // pred_check_branch
          %473 = sbr.rel (%p471) target = $region40
        $region39: #{tpu_custom_call.1} parent=35 // pred_region
          %s474 = sand.u32 %s53, 1
          %s475 = scalar_lea.sflag [#allocation5], %s474
          %s476 = sand.u32 %s53, 1
          %s477 = smul.addr %s476, 32
          %s478 = scalar_lea.vmem [#allocation6], %s477
          %479 = dma.done %s475, 512
        $region40: #{tpu_custom_call.1} parent=35 // pred_fallthru
          _
      $region36: #{tpu_custom_call.1} parent=5 // pred_fallthru
        _
    $region6: #{tpu_custom_call.1} parent=1 // loop_footer
      %s17 = sadd.s32 1, %s13
    $region7: #{tpu_custom_call.1} parent=1 // loop_footer_branch
      %12 = sbr.rel target = $region3
    $region8: #{tpu_custom_call.1} parent=1 // loop_exit
      _
    %480 = vsyncpa [#allocation4], 1
    %s481 = scalar_lea.sflag [#allocation4], 1
    %482 = vsyncpa %s481, 1
    %483 = vsyncpa [#allocation5], 1
    %s484 = scalar_lea.sflag [#allocation5], 1
    %485 = vsyncpa %s484, 1

</llo_original>
